<compile_context>
chip_gen: v6e
topology: v6e:2x2x1
jax: 0.10.0
libtpu: 0.0.40
codegen_flags: <defaults>
</compile_context>

<pallas_src>
import functools

import jax
import jax.numpy as jnp
from jax.experimental import pallas as pl
from jax.experimental.pallas import tpu as pltpu


def _round_up(x, m):
    return (x + m - 1) // m * m


# ---------------- phase 1: conv tile + per-tile BN partial sums -------------


def _conv_stats_kernel(p_ref, w_ref, y_ref, stat_ref):
    """p_ref:    (TM, KC)       im2col patches (compute dtype)
       w_ref:    (KC, C_pad)    flattened conv weights (compute dtype)
       y_ref:    (TM, C_pad)    conv output tile (compute dtype)
       stat_ref: (1, 2, C_pad)  per-tile [sum(y), sum(y*y)] partials (f32)"""
    acc = jnp.dot(p_ref[...], w_ref[...], preferred_element_type=jnp.float32)
    y_ref[...] = acc.astype(y_ref.dtype)
    # Zero-padded tail rows have all-zero patches -> acc is exactly zero there,
    # so they contribute nothing to the partial sums (no mask operand needed;
    # the true element count is applied on the host side).
    s1 = jnp.sum(acc, axis=0, keepdims=True)           # (1, C_pad)
    s2 = jnp.sum(acc * acc, axis=0, keepdims=True)     # (1, C_pad)
    stat_ref[...] = jnp.concatenate([s1, s2], axis=0)[None, :, :]


# ---------------- phase 2: BN affine + ReLU epilogue -------------------------


def _bn_relu_kernel(y_ref, scale_ref, shift_ref, o_ref):
    """y_ref: (TM, C_pad) conv tile; scale/shift: (1, C_pad) folded BN params."""
    y = y_ref[...].astype(jnp.float32)
    o_ref[...] = jnp.maximum(y * scale_ref[...] + shift_ref[...], 0.0).astype(o_ref.dtype)


# ------------------------------ JAX wrapper ----------------------------------


@functools.partial(jax.jit, static_argnames=("compute_dtype", "block_m"))
def conv2d_bn_relu(x, weight, gamma, beta, *,
                   compute_dtype=jnp.bfloat16, block_m=128):
    """x: (N, C_in, H, W) f32; weight: (C_out, C_in, KH, KW) f32;
    gamma/beta: (C_out,) f32.  Returns (N, C_out, H_out, W_out) f32.
    block_m: rows per M tile (production would use 512-4096 per generation's
    VMEM budget; 128 keeps several tiles in flight at this test shape)."""
    n, c_in, h, w = x.shape
    c_out, c_in_w, kh, kw = weight.shape
    assert c_in == c_in_w
    h_out, w_out = h - kh + 1, w - kw + 1
    m = n * h_out * w_out                     # one row per valid output pixel
    kc = kh * kw * c_in                       # folded contraction depth
    c_pad = 128 * pl.cdiv(c_out, 128)         # lane-dense output channels
    tm = min(block_m, _round_up(m, 8))
    n_tiles = pl.cdiv(m, tm)
    m_pad = n_tiles * tm

    # im2col over valid output positions only (KW and KH folded into lanes).
    x_nhwc = jnp.transpose(x, (0, 2, 3, 1))   # (N, H, W, C_in)
    cols = [x_nhwc[:, i:i + h_out, j:j + w_out, :]
            for i in range(kh) for j in range(kw)]
    patches = jnp.concatenate(cols, axis=-1).reshape(m, kc)
    patches = jnp.pad(patches, ((0, m_pad - m), (0, 0))).astype(compute_dtype)

    # (C_out, C_in, KH, KW) -> (KC, C_pad), feature order (kh, kw, ci) to match.
    w2 = jnp.transpose(weight, (2, 3, 1, 0)).reshape(kc, c_out)
    w2 = jnp.pad(w2, ((0, 0), (0, c_pad - c_out))).astype(compute_dtype)

    # ---- phase 1: tiled conv + per-tile BN partials ("parallel" over M) ----
    y_conv, stats = pl.pallas_call(
        _conv_stats_kernel,
        out_shape=(jax.ShapeDtypeStruct((m_pad, c_pad), compute_dtype),
                   jax.ShapeDtypeStruct((n_tiles, 2, c_pad), jnp.float32)),
        grid=(n_tiles,),
        in_specs=[
            pl.BlockSpec((tm, kc), lambda i: (i, 0)),
            pl.BlockSpec((kc, c_pad), lambda i: (0, 0)),
        ],
        out_specs=(
            pl.BlockSpec((tm, c_pad), lambda i: (i, 0)),
            pl.BlockSpec((1, 2, c_pad), lambda i: (i, 0, 0)),
        ),
        compiler_params=pltpu.CompilerParams(
            dimension_semantics=("parallel",),
            vmem_limit_bytes=32 * 1024 * 1024),
    )(patches, w2)

    # ---- tiny host-side reduction of partials -> folded scale/shift --------
    s = jnp.sum(stats, axis=0)                         # (2, C_pad) f32
    inv_count = 1.0 / float(m)
    mean = s[0] * inv_count
    var = jnp.maximum(s[1] * inv_count - mean * mean, 0.0)   # guard cancellation
    gamma_p = jnp.pad(gamma.astype(jnp.float32), (0, c_pad - c_out))
    beta_p = jnp.pad(beta.astype(jnp.float32), (0, c_pad - c_out))
    scale = jax.lax.rsqrt(var + 1e-5) * gamma_p
    shift = beta_p - mean * scale

    # ---- phase 2: affine + ReLU ("parallel" over M, lane-dense output) -----
    out2d = pl.pallas_call(
        _bn_relu_kernel,
        out_shape=jax.ShapeDtypeStruct((m_pad, c_pad), jnp.float32),
        grid=(n_tiles,),
        in_specs=[
            pl.BlockSpec((tm, c_pad), lambda i: (i, 0)),
            pl.BlockSpec((1, c_pad), lambda i: (0, 0)),
            pl.BlockSpec((1, c_pad), lambda i: (0, 0)),
        ],
        out_specs=pl.BlockSpec((tm, c_pad), lambda i: (i, 0)),
        compiler_params=pltpu.CompilerParams(
            dimension_semantics=("parallel",),
            vmem_limit_bytes=32 * 1024 * 1024),
    )(y_conv, scale.reshape(1, c_pad), shift.reshape(1, c_pad))

    out = out2d[:m, :c_out].reshape(n, h_out, w_out, c_out)
    # NHWC -> NCHW kept only to honour the module's output layout; a fused
    # consumer would take the channels-last result directly.
    return jnp.transpose(out, (0, 3, 1, 2))


# ------------------------------- reference -----------------------------------


def reference(x, weight, gamma, beta):
    """Plain-JAX reference mirroring the PyTorch forward (training-mode BN)."""
    y = jax.lax.conv_general_dilated(
        x, weight, window_strides=(1, 1), padding="VALID",
        dimension_numbers=("NCHW", "OIHW", "NCHW"),
    )
    mean = jnp.mean(y, axis=(0, 2, 3), keepdims=True)
    var = jnp.mean((y - mean) ** 2, axis=(0, 2, 3), keepdims=True)
    y = (y - mean) * jax.lax.rsqrt(var + 1e-5)
    y = y * gamma[None, :, None, None] + beta[None, :, None, None]
    return jnp.maximum(y, 0.0)


if __name__ == "__main__":
    # Module config: in_channels=4, out_channels=8, kernel_size=3, bn=True, relu=True
    N, C_IN, C_OUT, K, H, W = 2, 4, 8, 3, 16, 16

    key = jax.random.PRNGKey(0)
    kx, kw_, kg, kb = jax.random.split(key, 4)
    x = jax.random.normal(kx, (N, C_IN, H, W), dtype=jnp.float32)
    # bias=False because bn=True.
    weight = 0.1 * jax.random.normal(kw_, (C_OUT, C_IN, K, K), dtype=jnp.float32)
    # Non-trivial BN affine parameters to exercise the full epilogue.
    gamma = 1.0 + 0.1 * jax.random.normal(kg, (C_OUT,), dtype=jnp.float32)
    beta = 0.1 * jax.random.normal(kb, (C_OUT,), dtype=jnp.float32)

    ref = reference(x, weight, gamma, beta)

    # f32 operand path: tight correctness check.
    out_f32 = jax.block_until_ready(
        conv2d_bn_relu(x, weight, gamma, beta, compute_dtype=jnp.float32))
    assert out_f32.shape == (N, C_OUT, H - K + 1, W - K + 1), out_f32.shape
    err_f32 = float(jnp.max(jnp.abs(out_f32 - ref)))
    assert jnp.allclose(out_f32, ref, atol=1e-3, rtol=1e-3), err_f32

    # bf16 operand path (production MXU path on v6e/v7x): looser tolerance.
    out_bf16 = jax.block_until_ready(
        conv2d_bn_relu(x, weight, gamma, beta, compute_dtype=jnp.bfloat16))
    err_bf16 = float(jnp.max(jnp.abs(out_bf16 - ref)))
    assert jnp.allclose(out_bf16, ref, atol=5e-2, rtol=5e-2), err_bf16

    print("KERNEL_OK")
</pallas_src>

<mosaic_0001>
module attributes {stable_mosaic.version = 11 : i64} {
  func.func @_conv_stats_kernel(%arg0: i32, %arg1: memref<128x36xf32, #tpu.memory_space<vmem>>, %arg2: memref<36x128xf32, #tpu.memory_space<vmem>>, %arg3: memref<128x128xf32, #tpu.memory_space<vmem>>, %arg4: memref<1x2x128xf32, #tpu.memory_space<vmem>>) attributes {dimension_semantics = [#tpu.dimension_semantics<parallel>], iteration_bounds = array<i64: 4>, scalar_prefetch = 0 : i64, scratch_operands = 0 : i64, tpu.core_type = #tpu.core_type<tc>, window_params = [{transform_indices = @transform_0, window_bounds = array<i64: 128, 36>}, {pipeline_mode = #tpu.pipeline_mode<synchronous>, transform_indices = @transform_1, window_bounds = array<i64: 36, 128>}, {transform_indices = @transform_2, window_bounds = array<i64: 128, 128>}, {transform_indices = @transform_3, window_bounds = array<i64: 1, 2, 128>}]} {
    %c0 = arith.constant 0 : index
    %c0_0 = arith.constant 0 : index
    %0 = vector.load %arg1[%c0, %c0_0] : memref<128x36xf32, #tpu.memory_space<vmem>>, vector<128x36xf32>
    %c0_1 = arith.constant 0 : index
    %c0_2 = arith.constant 0 : index
    %1 = vector.load %arg2[%c0_1, %c0_2] : memref<36x128xf32, #tpu.memory_space<vmem>>, vector<36x128xf32>
    %cst = arith.constant dense<0.000000e+00> : vector<128x128xf32>
    %2 = tpu.matmul %0, %1, %cst {dimension_numbers = #tpu.dot_dimension_numbers<[1], [0], [0], [1], [0, 0, 1, 1], [], []>} : vector<128x36xf32>, vector<36x128xf32>, vector<128x128xf32> -> vector<128x128xf32>
    %c0_3 = arith.constant 0 : index
    %c0_4 = arith.constant 0 : index
    %3 = vector.load %arg3[%c0_3, %c0_4] : memref<128x128xf32, #tpu.memory_space<vmem>>, vector<128x128xf32>
    tpu.vector_store %arg3[%c0_3, %c0_4], %2 {strides = array<i32>} : memref<128x128xf32, #tpu.memory_space<vmem>>, vector<128x128xf32>,
    %cst_5 = arith.constant dense<0.000000e+00> : vector<128xf32>
    %4 = vector.multi_reduction <add>, %2, %cst_5 [0] : vector<128x128xf32> to vector<128xf32>
    %5 = vector.shape_cast %4 : vector<128xf32> to vector<1x128xf32>
    %6 = arith.mulf %2, %2 : vector<128x128xf32>
    %cst_6 = arith.constant dense<0.000000e+00> : vector<128xf32>
    %7 = vector.multi_reduction <add>, %6, %cst_6 [0] : vector<128x128xf32> to vector<128xf32>
    %8 = vector.shape_cast %7 : vector<128xf32> to vector<1x128xf32>
    %9 = tpu.concatenate %5, %8 in 0 : vector<1x128xf32>, vector<1x128xf32> -> vector<2x128xf32>
    %10 = vector.shape_cast %9 : vector<2x128xf32> to vector<1x2x128xf32>
    %c0_7 = arith.constant 0 : index
    %c0_8 = arith.constant 0 : index
    %c0_9 = arith.constant 0 : index
    %11 = vector.load %arg4[%c0_7, %c0_8, %c0_9] : memref<1x2x128xf32, #tpu.memory_space<vmem>>, vector<1x2x128xf32>
    tpu.vector_store %arg4[%c0_7, %c0_8, %c0_9], %10 {strides = array<i32>} : memref<1x2x128xf32, #tpu.memory_space<vmem>>, vector<1x2x128xf32>,
    return
  }
  func.func @transform_0(%arg0: i32) -> (i32, i32) {
    %c0_i32 = arith.constant 0 : i32
    %c0_i32_0 = arith.constant 0 : i32
    return %arg0, %c0_i32 : i32, i32
  }
  func.func @transform_1(%arg0: i32) -> (i32, i32) {
    %c0_i32 = arith.constant 0 : i32
    %c0_i32_0 = arith.constant 0 : i32
    %c0_i32_1 = arith.constant 0 : i32
    return %c0_i32, %c0_i32_0 : i32, i32
  }
  func.func @transform_2(%arg0: i32) -> (i32, i32) {
    %c0_i32 = arith.constant 0 : i32
    %c0_i32_0 = arith.constant 0 : i32
    return %arg0, %c0_i32 : i32, i32
  }
  func.func @transform_3(%arg0: i32) -> (i32, i32, i32) {
    %c0_i32 = arith.constant 0 : i32
    %c0_i32_0 = arith.constant 0 : i32
    %c0_i32_1 = arith.constant 0 : i32
    return %arg0, %c0_i32, %c0_i32_0 : i32, i32, i32
  }
}

module attributes {stable_mosaic.version = 11 : i64} {
  func.func @_bn_relu_kernel(%arg0: i32, %arg1: memref<128x128xf32, #tpu.memory_space<vmem>>, %arg2: memref<1x128xf32, #tpu.memory_space<vmem>>, %arg3: memref<1x128xf32, #tpu.memory_space<vmem>>, %arg4: memref<128x128xf32, #tpu.memory_space<vmem>>) attributes {dimension_semantics = [#tpu.dimension_semantics<parallel>], iteration_bounds = array<i64: 4>, scalar_prefetch = 0 : i64, scratch_operands = 0 : i64, tpu.core_type = #tpu.core_type<tc>, window_params = [{transform_indices = @transform_0, window_bounds = array<i64: 128, 128>}, {pipeline_mode = #tpu.pipeline_mode<synchronous>, transform_indices = @transform_1, window_bounds = array<i64: 1, 128>}, {pipeline_mode = #tpu.pipeline_mode<synchronous>, transform_indices = @transform_2, window_bounds = array<i64: 1, 128>}, {transform_indices = @transform_3, window_bounds = array<i64: 128, 128>}]} {
    %c0 = arith.constant 0 : index
    %c0_0 = arith.constant 0 : index
    %0 = vector.load %arg1[%c0, %c0_0] : memref<128x128xf32, #tpu.memory_space<vmem>>, vector<128x128xf32>
    %c0_1 = arith.constant 0 : index
    %c0_2 = arith.constant 0 : index
    %1 = vector.load %arg2[%c0_1, %c0_2] : memref<1x128xf32, #tpu.memory_space<vmem>>, vector<1x128xf32>
    %2 = vector.broadcast %1 : vector<1x128xf32> to vector<128x128xf32>
    %3 = arith.mulf %0, %2 : vector<128x128xf32>
    %c0_3 = arith.constant 0 : index
    %c0_4 = arith.constant 0 : index
    %4 = vector.load %arg3[%c0_3, %c0_4] : memref<1x128xf32, #tpu.memory_space<vmem>>, vector<1x128xf32>
    %5 = vector.broadcast %4 : vector<1x128xf32> to vector<128x128xf32>
    %6 = arith.addf %3, %5 : vector<128x128xf32>
    %cst = arith.constant 0.000000e+00 : f32
    %7 = vector.broadcast %cst : f32 to vector<128x128xf32>
    %8 = arith.maximumf %6, %7 : vector<128x128xf32>
    %c0_5 = arith.constant 0 : index
    %c0_6 = arith.constant 0 : index
    %9 = vector.load %arg4[%c0_5, %c0_6] : memref<128x128xf32, #tpu.memory_space<vmem>>, vector<128x128xf32>
    tpu.vector_store %arg4[%c0_5, %c0_6], %8 {strides = array<i32>} : memref<128x128xf32, #tpu.memory_space<vmem>>, vector<128x128xf32>,
    return
  }
  func.func @transform_0(%arg0: i32) -> (i32, i32) {
    %c0_i32 = arith.constant 0 : i32
    %c0_i32_0 = arith.constant 0 : i32
    return %arg0, %c0_i32 : i32, i32
  }
  func.func @transform_1(%arg0: i32) -> (i32, i32) {
    %c0_i32 = arith.constant 0 : i32
    %c0_i32_0 = arith.constant 0 : i32
    %c0_i32_1 = arith.constant 0 : i32
    return %c0_i32, %c0_i32_0 : i32, i32
  }
  func.func @transform_2(%arg0: i32) -> (i32, i32) {
    %c0_i32 = arith.constant 0 : i32
    %c0_i32_0 = arith.constant 0 : i32
    %c0_i32_1 = arith.constant 0 : i32
    return %c0_i32, %c0_i32_0 : i32, i32
  }
  func.func @transform_3(%arg0: i32) -> (i32, i32) {
    %c0_i32 = arith.constant 0 : i32
    %c0_i32_0 = arith.constant 0 : i32
    return %arg0, %c0_i32 : i32, i32
  }
}

</mosaic_0001>

<llo_original>
// kernel: conv2d_bn_relu.3
$region0: #{conv2d_bn_relu.3}
  #allocation0 [shape = 'u32[]', space=smem, size = 0x4, offset = 0x4, fixed_abs, tag = 'smem constant byte address 0x4 - core index']
  #allocation1 [shape = 'u32[144,128]{1,0:T(1,128)}', space=vmem, size = 0x12000, scoped, tag = 'internal scratch']
  %s0 = inlined_call_operand.vmem [shape: f32[512,128], index: 0, kind: input, shape index: {}]
  %s1 = inlined_call_operand.vmem [shape: f32[1,128], index: 1, kind: input, shape index: {}]
  %s2 = inlined_call_operand.vmem [shape: f32[1,128], index: 2, kind: input, shape index: {}]
  %s3 = inlined_call_operand.vmem [shape: f32[512,128], index: 3, kind: output, shape index: {}]
  %s4 = sld [smem:[#allocation0]]
  $region45: #{conv2d_bn_relu.3} parent=0
    _
  %s6 = ssub.s32 1, %s4
  %s7 = scalar_select 0, %s6, %s4
  loop: start=0, step=1, limit=6
  $region2: #{conv2d_bn_relu.3} parent=0 // loop_pre_header
    _
  $region3: #{conv2d_bn_relu.3} parent=0 // loop_header
    %s9 = sphi 0, %s13
    %p10 = scmp.ge.s32.totalorder %s9, 6
    %s19 = sphi 0, %s21
    %s22 = sphi 0, %s19
    %s23 = sphi 0, %s22
    %s39 = sphi 0, %s23
    %s43 = sphi 0, %s43
    %s45 = sphi 0, %s43
    %s46 = sphi 0, %s45
    %s60 = sphi 0, %s46
    %s64 = sphi 0, %s64
    %s66 = sphi 0, %s64
    %s67 = sphi 0, %s66
    %s81 = sphi 0, %s67
    %s87 = sphi 0, %s89
    %s90 = sphi 0, %s87
    %s91 = sphi 0, %s90
    %s107 = sphi 0, %s91
  $region4: #{conv2d_bn_relu.3} parent=0 // loop_header_branch
    %12 = sbr.rel (%p10) target = $region8
  $region5: #{conv2d_bn_relu.3} parent=0 // loop_body
    %s14 = ssub.s32 %s9, 1
    %s15 = ssub.s32 %s9, 2
    %s16 = sadd.s32 %s9, 1
    %s17 = ssub.s32 %s9, %s16
    %p18 = scmp.eq.s32.totalorder %s17, 0
    %s20 = sadd.s32 %s19, 1
    %s21 = scalar_select %p18, %s19, %s20
    %p24 = pneg %p18
    %p25 = scmp.eq.s32.totalorder %s9, 3
    %p26 = por %p24, %p25
    %p27 = scmp.ne.s32.totalorder %s19, %s22
    %p28 = scmp.eq.s32.totalorder %s9, 0
    %p29 = por %p27, %p28
    %p30 = scmp.ne.s32.totalorder %s19, %s22
    %p31 = scmp.eq.s32.totalorder %s14, 3
    %p32 = por %p30, %p31
    %p33 = scmp.ne.s32.totalorder %s22, %s23
    %p34 = scmp.eq.s32.totalorder %s14, 0
    %p35 = por %p33, %p34
    %p36 = scmp.ne.s32.totalorder %s22, %s23
    %p37 = scmp.eq.s32.totalorder %s15, 3
    %p38 = por %p36, %p37
    %p40 = scmp.ne.s32.totalorder %s23, %s39
    %p41 = scmp.eq.s32.totalorder %s15, 0
    %p42 = por %p40, %p41
    %s44 = sadd.s32 %s43, 1
    %p47 = scmp.eq.s32.totalorder %s9, 3
    %p48 = scmp.ne.s32.totalorder %s43, %s45
    %p49 = scmp.eq.s32.totalorder %s9, 0
    %p50 = por %p48, %p49
    %p51 = scmp.ne.s32.totalorder %s43, %s45
    %p52 = scmp.eq.s32.totalorder %s14, 3
    %p53 = por %p51, %p52
    %p54 = scmp.ne.s32.totalorder %s45, %s46
    %p55 = scmp.eq.s32.totalorder %s14, 0
    %p56 = por %p54, %p55
    %p57 = scmp.ne.s32.totalorder %s45, %s46
    %p58 = scmp.eq.s32.totalorder %s15, 3
    %p59 = por %p57, %p58
    %p61 = scmp.ne.s32.totalorder %s46, %s60
    %p62 = scmp.eq.s32.totalorder %s15, 0
    %p63 = por %p61, %p62
    %s65 = sadd.s32 %s64, 1
    %p68 = scmp.eq.s32.totalorder %s9, 3
    %p69 = scmp.ne.s32.totalorder %s64, %s66
    %p70 = scmp.eq.s32.totalorder %s9, 0
    %p71 = por %p69, %p70
    %p72 = scmp.ne.s32.totalorder %s64, %s66
    %p73 = scmp.eq.s32.totalorder %s14, 3
    %p74 = por %p72, %p73
    %p75 = scmp.ne.s32.totalorder %s66, %s67
    %p76 = scmp.eq.s32.totalorder %s14, 0
    %p77 = por %p75, %p76
    %p78 = scmp.ne.s32.totalorder %s66, %s67
    %p79 = scmp.eq.s32.totalorder %s15, 3
    %p80 = por %p78, %p79
    %p82 = scmp.ne.s32.totalorder %s67, %s81
    %p83 = scmp.eq.s32.totalorder %s15, 0
    %p84 = por %p82, %p83
    %s85 = ssub.s32 %s9, %s16
    %p86 = scmp.eq.s32.totalorder %s85, 0
    %s88 = sadd.s32 %s87, 1
    %s89 = scalar_select %p86, %s87, %s88
    %p92 = pneg %p86
    %p93 = scmp.eq.s32.totalorder %s9, 3
    %p94 = por %p92, %p93
    %p95 = scmp.ne.s32.totalorder %s87, %s90
    %p96 = scmp.eq.s32.totalorder %s9, 0
    %p97 = por %p95, %p96
    %p98 = scmp.ne.s32.totalorder %s87, %s90
    %p99 = scmp.eq.s32.totalorder %s14, 3
    %p100 = por %p98, %p99
    %p101 = scmp.ne.s32.totalorder %s90, %s91
    %p102 = scmp.eq.s32.totalorder %s14, 0
    %p103 = por %p101, %p102
    %p104 = scmp.ne.s32.totalorder %s90, %s91
    %p105 = scmp.eq.s32.totalorder %s15, 3
    %p106 = por %p104, %p105
    %p108 = scmp.ne.s32.totalorder %s91, %s107
    %p109 = scmp.eq.s32.totalorder %s15, 0
    %p110 = por %p108, %p109
    %p111 = scmp.le.s32.totalorder 1, %s9
    %p112 = scmp.lt.s32.totalorder %s9, 5
    %p113 = pnand %p111, %p112
    %p114 = pneg %p113
    // Predicated region
    $region9: #{conv2d_bn_relu.3} parent=5 // pred_check
      _
    $region10: #{conv2d_bn_relu.3} parent=5 // pred_check_branch
      %116 = sbr.rel (%p113) target = $region12
    $region11: #{conv2d_bn_relu.3} parent=5 // pred_region
      %s117 = ssub.s32 %s9, 1
      // Predicated region
      $region13: #{conv2d_bn_relu.3} parent=11 // pred_check
        %p118 = pneg %p56
      $region14: #{conv2d_bn_relu.3} parent=11 // pred_check_branch
        %120 = sbr.rel (%p118) target = $region16
      $region15: #{conv2d_bn_relu.3} parent=11 // pred_region
        _
      $region16: #{conv2d_bn_relu.3} parent=11 // pred_fallthru
        _
      // Predicated region
      $region17: #{conv2d_bn_relu.3} parent=11 // pred_check
        %p121 = pneg %p77
      $region18: #{conv2d_bn_relu.3} parent=11 // pred_check_branch
        %123 = sbr.rel (%p121) target = $region20
      $region19: #{conv2d_bn_relu.3} parent=11 // pred_region
        _
      $region20: #{conv2d_bn_relu.3} parent=11 // pred_fallthru
        _
    $region12: #{conv2d_bn_relu.3} parent=5 // pred_fallthru
      _
    %p124 = scmp.lt.s32.totalorder %s9, 4
    // Predicated region
    $region21: #{conv2d_bn_relu.3} parent=5 // pred_check
      %p125 = pneg %p124
    $region22: #{conv2d_bn_relu.3} parent=5 // pred_check_branch
      %127 = sbr.rel (%p125) target = $region24
    $region23: #{conv2d_bn_relu.3} parent=5 // pred_region
      // Predicated region
      $region25: #{conv2d_bn_relu.3} parent=23 // pred_check
        %p128 = pneg %p29
      $region26: #{conv2d_bn_relu.3} parent=23 // pred_check_branch
        %130 = sbr.rel (%p128) target = $region28
      $region27: #{conv2d_bn_relu.3} parent=23 // pred_region
        %s131 = smul.u32 16, %s9
        %p132 = scmp.lt.s32.totalorder %s131, 63
        %s133 = scalar_select %p132, %s131, 63
        %s134 = smul.addr %s133, 8
        %s135 = scalar_lea.vmem %s0, %s134
        %s136 = smul.u32 16, %s9
      $region28: #{conv2d_bn_relu.3} parent=23 // pred_fallthru
        _
    $region24: #{conv2d_bn_relu.3} parent=5 // pred_fallthru
      _
    %p137 = scmp.le.s32.totalorder 1, %s9
    %p138 = scmp.lt.s32.totalorder %s9, 5
    %p139 = pnand %p137, %p138
    %p140 = pneg %p139
    // Predicated region
    $region29: #{conv2d_bn_relu.3} parent=5 // pred_check
      _
    $region30: #{conv2d_bn_relu.3} parent=5 // pred_check_branch
      %142 = sbr.rel (%p139) target = $region32
    $region31: #{conv2d_bn_relu.3} parent=5 // pred_region
      %s143 = ssub.s32 %s9, 1
      %s144 = smul.u32 16, %s14
      %p145 = scmp.lt.s32.totalorder %s144, 63
      %s146 = scalar_select %p145, %s144, 63
      %s147 = smul.addr %s146, 8
      %s148 = scalar_lea.vmem %s0, %s147
      %p149 = pneg %p35
      %p150 = pneg %p32
      %p151 = pneg %p56
      %p152 = pneg %p53
      %p153 = pneg %p77
      %p154 = pneg %p74
      %p155 = pneg %p103
      %p156 = pneg %p100
      %s157 = smul.u32 16, %s14
      %p158 = scmp.lt.s32.totalorder %s157, 63
      %s159 = scalar_select %p158, %s157, 63
      %s160 = smul.addr %s159, 8
      %s161 = scalar_lea.vmem %s3, %s160
      %s162 = smul.u32 16, %s14
      %p163 = scmp.lt.s32.totalorder %s162, 63
      %s164 = scalar_select %p163, %s162, 63
      %s165 = smul.addr %s164, 8
      %s166 = scalar_lea.vmem %s0, %s165
      %s167 = smul.u32 16, %s14
      %s168 = smul.u32 16, %s14
      %p169 = scmp.lt.s32.totalorder %s168, 63
      %s170 = scalar_select %p169, %s168, 63
      %s171 = smul.addr %s170, 8
      %s172 = scalar_lea.vmem %s3, %s171
      %s173 = smul.u32 16, %s14
      %v174 = vld [vmem:[%s166] sm:$0xff]
      %v175 = vld [vmem:[%s166 + $0x8] sm:$0xff]
      %v176 = vld [vmem:[%s166 + $0x10] sm:$0xff]
      %v177 = vld [vmem:[%s166 + $0x18] sm:$0xff]
      %v178 = vld [vmem:[%s166 + $0x20] sm:$0xff]
      %v179 = vld [vmem:[%s166 + $0x28] sm:$0xff]
      %v180 = vld [vmem:[%s166 + $0x30] sm:$0xff]
      %v181 = vld [vmem:[%s166 + $0x38] sm:$0xff]
      %v182 = vld [vmem:[%s166 + $0x40] sm:$0xff]
      %v183 = vld [vmem:[%s166 + $0x48] sm:$0xff]
      %v184 = vld [vmem:[%s166 + $0x50] sm:$0xff]
      %v185 = vld [vmem:[%s166 + $0x58] sm:$0xff]
      %v186 = vld [vmem:[%s166 + $0x60] sm:$0xff]
      %v187 = vld [vmem:[%s166 + $0x68] sm:$0xff]
      %v188 = vld [vmem:[%s166 + $0x70] sm:$0xff]
      %v189 = vld [vmem:[%s166 + $0x78] sm:$0xff]
      %v190 = vld [vmem:[%s1] sm:$0x1]
      %v192 = vlaneseq
      %v193 = vshrl.u32 %v192, 7
      %v194 = vsub.s32 0, %v193
      %v195 = vrot.slane %v190, %v194
      %v197 = vmul.f32 %v174, %v195
      %v198 = vmul.f32 %v175, %v195
      %v199 = vmul.f32 %v176, %v195
      %v200 = vmul.f32 %v177, %v195
      %v201 = vmul.f32 %v178, %v195
      %v202 = vmul.f32 %v179, %v195
      %v203 = vmul.f32 %v180, %v195
      %v204 = vmul.f32 %v181, %v195
      %v205 = vmul.f32 %v182, %v195
      %v206 = vmul.f32 %v183, %v195
      %v207 = vmul.f32 %v184, %v195
      %v208 = vmul.f32 %v185, %v195
      %v209 = vmul.f32 %v186, %v195
      %v210 = vmul.f32 %v187, %v195
      %v211 = vmul.f32 %v188, %v195
      %v212 = vmul.f32 %v189, %v195
      %v213 = vld [vmem:[%s2] sm:$0x1]
      %v215 = vlaneseq
      %v216 = vshrl.u32 %v215, 7
      %v217 = vsub.s32 0, %v216
      %v218 = vrot.slane %v213, %v217
      %v220 = vadd.f32 %v197, %v218
      %v221 = vadd.f32 %v198, %v218
      %v222 = vadd.f32 %v199, %v218
      %v223 = vadd.f32 %v200, %v218
      %v224 = vadd.f32 %v201, %v218
      %v225 = vadd.f32 %v202, %v218
      %v226 = vadd.f32 %v203, %v218
      %v227 = vadd.f32 %v204, %v218
      %v228 = vadd.f32 %v205, %v218
      %v229 = vadd.f32 %v206, %v218
      %v230 = vadd.f32 %v207, %v218
      %v231 = vadd.f32 %v208, %v218
      %v232 = vadd.f32 %v209, %v218
      %v233 = vadd.f32 %v210, %v218
      %v234 = vadd.f32 %v211, %v218
      %v235 = vadd.f32 %v212, %v218
      %v236 = vmax.f32 %v220, 0.0
      %v237 = vmax.f32 %v221, 0.0
      %v238 = vmax.f32 %v222, 0.0
      %v239 = vmax.f32 %v223, 0.0
      %v240 = vmax.f32 %v224, 0.0
      %v241 = vmax.f32 %v225, 0.0
      %v242 = vmax.f32 %v226, 0.0
      %v243 = vmax.f32 %v227, 0.0
      %v244 = vmax.f32 %v228, 0.0
      %v245 = vmax.f32 %v229, 0.0
      %v246 = vmax.f32 %v230, 0.0
      %v247 = vmax.f32 %v231, 0.0
      %v248 = vmax.f32 %v232, 0.0
      %v249 = vmax.f32 %v233, 0.0
      %v250 = vmax.f32 %v234, 0.0
      %v251 = vmax.f32 %v235, 0.0
      %252 = vst [vmem:[%s172] sm:$0xff] %v236
      %253 = vst [vmem:[%s172 + $0x8] sm:$0xff] %v237
      %254 = vst [vmem:[%s172 + $0x10] sm:$0xff] %v238
      %255 = vst [vmem:[%s172 + $0x18] sm:$0xff] %v239
      %256 = vst [vmem:[%s172 + $0x20] sm:$0xff] %v240
      %257 = vst [vmem:[%s172 + $0x28] sm:$0xff] %v241
      %258 = vst [vmem:[%s172 + $0x30] sm:$0xff] %v242
      %259 = vst [vmem:[%s172 + $0x38] sm:$0xff] %v243
      %260 = vst [vmem:[%s172 + $0x40] sm:$0xff] %v244
      %261 = vst [vmem:[%s172 + $0x48] sm:$0xff] %v245
      %262 = vst [vmem:[%s172 + $0x50] sm:$0xff] %v246
      %263 = vst [vmem:[%s172 + $0x58] sm:$0xff] %v247
      %264 = vst [vmem:[%s172 + $0x60] sm:$0xff] %v248
      %265 = vst [vmem:[%s172 + $0x68] sm:$0xff] %v249
      %266 = vst [vmem:[%s172 + $0x70] sm:$0xff] %v250
      %267 = vst [vmem:[%s172 + $0x78] sm:$0xff] %v251
      %s268 = smul.u32 16, %s14
      %p269 = scmp.lt.s32.totalorder %s268, 63
      %s270 = scalar_select %p269, %s268, 63
      %s271 = smul.addr %s270, 8
      %s272 = scalar_lea.vmem %s3, %s271
      // Predicated region
      $region33: #{conv2d_bn_relu.3} parent=31 // pred_check
        %p273 = pneg %p100
      $region34: #{conv2d_bn_relu.3} parent=31 // pred_check_branch
        %275 = sbr.rel (%p273) target = $region36
      $region35: #{conv2d_bn_relu.3} parent=31 // pred_region
        %s276 = smul.u32 16, %s14
      $region36: #{conv2d_bn_relu.3} parent=31 // pred_fallthru
        _
    $region32: #{conv2d_bn_relu.3} parent=5 // pred_fallthru
      _
    %p277 = scmp.le.s32.totalorder 2, %s9
    // Predicated region
    $region37: #{conv2d_bn_relu.3} parent=5 // pred_check
      %p278 = pneg %p277
    $region38: #{conv2d_bn_relu.3} parent=5 // pred_check_branch
      %280 = sbr.rel (%p278) target = $region40
    $region39: #{conv2d_bn_relu.3} parent=5 // pred_region
      %s281 = ssub.s32 %s9, 2
      // Predicated region
      $region41: #{conv2d_bn_relu.3} parent=39 // pred_check
        %p282 = pneg %p106
      $region42: #{conv2d_bn_relu.3} parent=39 // pred_check_branch
        %284 = sbr.rel (%p282) target = $region44
      $region43: #{conv2d_bn_relu.3} parent=39 // pred_region
        %s285 = smul.u32 16, %s15
        %p286 = scmp.lt.s32.totalorder %s285, 63
        %s287 = scalar_select %p286, %s285, 63
        %s288 = smul.addr %s287, 8
        %s289 = scalar_lea.vmem %s3, %s288
      $region44: #{conv2d_bn_relu.3} parent=39 // pred_fallthru
        _
    $region40: #{conv2d_bn_relu.3} parent=5 // pred_fallthru
      _
  $region6: #{conv2d_bn_relu.3} parent=0 // loop_footer
    %s13 = sadd.s32 1, %s9
  $region7: #{conv2d_bn_relu.3} parent=0 // loop_footer_branch
    %8 = sbr.rel target = $region3
  $region8: #{conv2d_bn_relu.3} parent=0 // loop_exit
    _

// kernel: conv2d_bn_relu.2
$region0: #{conv2d_bn_relu.2}
  #allocation0 [shape = 'u32[]', space=smem, size = 0x4, offset = 0x4, fixed_abs, tag = 'smem constant byte address 0x4 - core index']
  #allocation1 [shape = 'u32[144,128]{1,0:T(1,128)}', space=vmem, size = 0x12000, scoped, tag = 'internal scratch']
  %s0 = inlined_call_operand.vmem [shape: f32[512,36], index: 0, kind: input, shape index: {}]
  %s1 = inlined_call_operand.vmem [shape: f32[36,128], index: 1, kind: input, shape index: {}]
  %s2 = inlined_call_operand.vmem [shape: f32[512,128], index: 2, kind: output, shape index: {0}]
  %s3 = inlined_call_operand.vmem [shape: f32[4,2,128], index: 3, kind: output, shape index: {1}]
  %4 = xla_tuple %s2, %s3
  %s5 = sld [smem:[#allocation0]]
  $region49: #{conv2d_bn_relu.2} parent=0
    _
  %s7 = ssub.s32 1, %s5
  %s8 = scalar_select 0, %s7, %s5
  loop: start=0, step=1, limit=6
  $region2: #{conv2d_bn_relu.2} parent=0 // loop_pre_header
    _
  $region3: #{conv2d_bn_relu.2} parent=0 // loop_header
    %s10 = sphi 0, %s14
    %p11 = scmp.ge.s32.totalorder %s10, 6
    %s20 = sphi 0, %s22
    %s23 = sphi 0, %s20
    %s24 = sphi 0, %s23
    %s40 = sphi 0, %s24
    %s44 = sphi 0, %s44
    %s46 = sphi 0, %s44
    %s47 = sphi 0, %s46
    %s61 = sphi 0, %s47
    %s67 = sphi 0, %s69
    %s70 = sphi 0, %s67
    %s71 = sphi 0, %s70
    %s87 = sphi 0, %s71
    %s93 = sphi 0, %s95
    %s96 = sphi 0, %s93
    %s97 = sphi 0, %s96
    %s113 = sphi 0, %s97
  $region4: #{conv2d_bn_relu.2} parent=0 // loop_header_branch
    %13 = sbr.rel (%p11) target = $region8
  $region5: #{conv2d_bn_relu.2} parent=0 // loop_body
    %s15 = ssub.s32 %s10, 1
    %s16 = ssub.s32 %s10, 2
    %s17 = sadd.s32 %s10, 1
    %s18 = ssub.s32 %s10, %s17
    %p19 = scmp.eq.s32.totalorder %s18, 0
    %s21 = sadd.s32 %s20, 1
    %s22 = scalar_select %p19, %s20, %s21
    %p25 = pneg %p19
    %p26 = scmp.eq.s32.totalorder %s10, 3
    %p27 = por %p25, %p26
    %p28 = scmp.ne.s32.totalorder %s20, %s23
    %p29 = scmp.eq.s32.totalorder %s10, 0
    %p30 = por %p28, %p29
    %p31 = scmp.ne.s32.totalorder %s20, %s23
    %p32 = scmp.eq.s32.totalorder %s15, 3
    %p33 = por %p31, %p32
    %p34 = scmp.ne.s32.totalorder %s23, %s24
    %p35 = scmp.eq.s32.totalorder %s15, 0
    %p36 = por %p34, %p35
    %p37 = scmp.ne.s32.totalorder %s23, %s24
    %p38 = scmp.eq.s32.totalorder %s16, 3
    %p39 = por %p37, %p38
    %p41 = scmp.ne.s32.totalorder %s24, %s40
    %p42 = scmp.eq.s32.totalorder %s16, 0
    %p43 = por %p41, %p42
    %s45 = sadd.s32 %s44, 1
    %p48 = scmp.eq.s32.totalorder %s10, 3
    %p49 = scmp.ne.s32.totalorder %s44, %s46
    %p50 = scmp.eq.s32.totalorder %s10, 0
    %p51 = por %p49, %p50
    %p52 = scmp.ne.s32.totalorder %s44, %s46
    %p53 = scmp.eq.s32.totalorder %s15, 3
    %p54 = por %p52, %p53
    %p55 = scmp.ne.s32.totalorder %s46, %s47
    %p56 = scmp.eq.s32.totalorder %s15, 0
    %p57 = por %p55, %p56
    %p58 = scmp.ne.s32.totalorder %s46, %s47
    %p59 = scmp.eq.s32.totalorder %s16, 3
    %p60 = por %p58, %p59
    %p62 = scmp.ne.s32.totalorder %s47, %s61
    %p63 = scmp.eq.s32.totalorder %s16, 0
    %p64 = por %p62, %p63
    %s65 = ssub.s32 %s10, %s17
    %p66 = scmp.eq.s32.totalorder %s65, 0
    %s68 = sadd.s32 %s67, 1
    %s69 = scalar_select %p66, %s67, %s68
    %p72 = pneg %p66
    %p73 = scmp.eq.s32.totalorder %s10, 3
    %p74 = por %p72, %p73
    %p75 = scmp.ne.s32.totalorder %s67, %s70
    %p76 = scmp.eq.s32.totalorder %s10, 0
    %p77 = por %p75, %p76
    %p78 = scmp.ne.s32.totalorder %s67, %s70
    %p79 = scmp.eq.s32.totalorder %s15, 3
    %p80 = por %p78, %p79
    %p81 = scmp.ne.s32.totalorder %s70, %s71
    %p82 = scmp.eq.s32.totalorder %s15, 0
    %p83 = por %p81, %p82
    %p84 = scmp.ne.s32.totalorder %s70, %s71
    %p85 = scmp.eq.s32.totalorder %s16, 3
    %p86 = por %p84, %p85
    %p88 = scmp.ne.s32.totalorder %s71, %s87
    %p89 = scmp.eq.s32.totalorder %s16, 0
    %p90 = por %p88, %p89
    %s91 = ssub.s32 %s10, %s17
    %p92 = scmp.eq.s32.totalorder %s91, 0
    %s94 = sadd.s32 %s93, 1
    %s95 = scalar_select %p92, %s93, %s94
    %p98 = pneg %p92
    %p99 = scmp.eq.s32.totalorder %s10, 3
    %p100 = por %p98, %p99
    %p101 = scmp.ne.s32.totalorder %s93, %s96
    %p102 = scmp.eq.s32.totalorder %s10, 0
    %p103 = por %p101, %p102
    %p104 = scmp.ne.s32.totalorder %s93, %s96
    %p105 = scmp.eq.s32.totalorder %s15, 3
    %p106 = por %p104, %p105
    %p107 = scmp.ne.s32.totalorder %s96, %s97
    %p108 = scmp.eq.s32.totalorder %s15, 0
    %p109 = por %p107, %p108
    %p110 = scmp.ne.s32.totalorder %s96, %s97
    %p111 = scmp.eq.s32.totalorder %s16, 3
    %p112 = por %p110, %p111
    %p114 = scmp.ne.s32.totalorder %s97, %s113
    %p115 = scmp.eq.s32.totalorder %s16, 0
    %p116 = por %p114, %p115
    %p117 = scmp.le.s32.totalorder 1, %s10
    %p118 = scmp.lt.s32.totalorder %s10, 5
    %p119 = pnand %p117, %p118
    %p120 = pneg %p119
    // Predicated region
    $region9: #{conv2d_bn_relu.2} parent=5 // pred_check
      _
    $region10: #{conv2d_bn_relu.2} parent=5 // pred_check_branch
      %122 = sbr.rel (%p119) target = $region12
    $region11: #{conv2d_bn_relu.2} parent=5 // pred_region
      %s123 = ssub.s32 %s10, 1
      // Predicated region
      $region13: #{conv2d_bn_relu.2} parent=11 // pred_check
        %p124 = pneg %p57
      $region14: #{conv2d_bn_relu.2} parent=11 // pred_check_branch
        %126 = sbr.rel (%p124) target = $region16
      $region15: #{conv2d_bn_relu.2} parent=11 // pred_region
        _
      $region16: #{conv2d_bn_relu.2} parent=11 // pred_fallthru
        _
    $region12: #{conv2d_bn_relu.2} parent=5 // pred_fallthru
      _
    %p127 = scmp.lt.s32.totalorder %s10, 4
    // Predicated region
    $region17: #{conv2d_bn_relu.2} parent=5 // pred_check
      %p128 = pneg %p127
    $region18: #{conv2d_bn_relu.2} parent=5 // pred_check_branch
      %130 = sbr.rel (%p128) target = $region20
    $region19: #{conv2d_bn_relu.2} parent=5 // pred_region
      // Predicated region
      $region21: #{conv2d_bn_relu.2} parent=19 // pred_check
        %p131 = pneg %p30
      $region22: #{conv2d_bn_relu.2} parent=19 // pred_check_branch
        %133 = sbr.rel (%p131) target = $region24
      $region23: #{conv2d_bn_relu.2} parent=19 // pred_region
        %s134 = smul.u32 16, %s10
        %p135 = scmp.lt.s32.totalorder %s134, 63
        %s136 = scalar_select %p135, %s134, 63
        %s137 = smul.addr %s136, 8
        %s138 = scalar_lea.vmem %s0, %s137
        %s139 = smul.u32 16, %s10
      $region24: #{conv2d_bn_relu.2} parent=19 // pred_fallthru
        _
    $region20: #{conv2d_bn_relu.2} parent=5 // pred_fallthru
      _
    %p140 = scmp.le.s32.totalorder 1, %s10
    %p141 = scmp.lt.s32.totalorder %s10, 5
    %p142 = pnand %p140, %p141
    %p143 = pneg %p142
    // Predicated region
    $region25: #{conv2d_bn_relu.2} parent=5 // pred_check
      _
    $region26: #{conv2d_bn_relu.2} parent=5 // pred_check_branch
      %145 = sbr.rel (%p142) target = $region28
    $region27: #{conv2d_bn_relu.2} parent=5 // pred_region
      %s146 = ssub.s32 %s10, 1
      %s147 = smul.u32 16, %s15
      %p148 = scmp.lt.s32.totalorder %s147, 63
      %s149 = scalar_select %p148, %s147, 63
      %s150 = smul.addr %s149, 8
      %s151 = scalar_lea.vmem %s0, %s150
      %p152 = pneg %p36
      %p153 = pneg %p33
      %p154 = pneg %p57
      %p155 = pneg %p54
      %p156 = pneg %p83
      %p157 = pneg %p80
      %s158 = smul.u32 16, %s15
      %p159 = scmp.lt.s32.totalorder %s158, 63
      %s160 = scalar_select %p159, %s158, 63
      %s161 = smul.addr %s160, 8
      %s162 = scalar_lea.vmem %s2, %s161
      %p163 = pneg %p109
      %p164 = pneg %p106
      %p165 = scmp.lt.s32.totalorder %s15, 3
      %s166 = scalar_select %p165, %s15, 3
      %s167 = smul.addr %s166, 2
      %s168 = scalar_lea.vmem %s3, %s167
      %s169 = smul.u32 16, %s15
      %p170 = scmp.lt.s32.totalorder %s169, 63
      %s171 = scalar_select %p170, %s169, 63
      %s172 = smul.addr %s171, 8
      %s173 = scalar_lea.vmem %s0, %s172
      %s174 = smul.u32 16, %s15
      %s175 = smul.u32 16, %s15
      %p176 = scmp.lt.s32.totalorder %s175, 63
      %s177 = scalar_select %p176, %s175, 63
      %s178 = smul.addr %s177, 8
      %s179 = scalar_lea.vmem %s2, %s178
      %s180 = smul.u32 16, %s15
      %p181 = scmp.lt.s32.totalorder %s15, 3
      %s182 = scalar_select %p181, %s15, 3
      %s183 = smul.addr %s182, 2
      %s184 = scalar_lea.vmem %s3, %s183
      %v185 = vld [vmem:[%s173] sm:$0xff]
      %v186 = vld [vmem:[%s173 + $0x8] sm:$0xff]
      %v187 = vld [vmem:[%s173 + $0x10] sm:$0xff]
      %v188 = vld [vmem:[%s173 + $0x18] sm:$0xff]
      %v189 = vld [vmem:[%s173 + $0x20] sm:$0xff]
      %v190 = vld [vmem:[%s173 + $0x28] sm:$0xff]
      %v191 = vld [vmem:[%s173 + $0x30] sm:$0xff]
      %v192 = vld [vmem:[%s173 + $0x38] sm:$0xff]
      %v193 = vld [vmem:[%s173 + $0x40] sm:$0xff]
      %v194 = vld [vmem:[%s173 + $0x48] sm:$0xff]
      %v195 = vld [vmem:[%s173 + $0x50] sm:$0xff]
      %v196 = vld [vmem:[%s173 + $0x58] sm:$0xff]
      %v197 = vld [vmem:[%s173 + $0x60] sm:$0xff]
      %v198 = vld [vmem:[%s173 + $0x68] sm:$0xff]
      %v199 = vld [vmem:[%s173 + $0x70] sm:$0xff]
      %v200 = vld [vmem:[%s173 + $0x78] sm:$0xff]
      %v201 = vld [vmem:[%s1] sm:$0xff]
      %v202 = vld [vmem:[%s1 + $0x8] sm:$0xff]
      %v203 = vld [vmem:[%s1 + $0x10] sm:$0xff]
      %v204 = vld [vmem:[%s1 + $0x18] sm:$0xff]
      %v205 = vld [vmem:[%s1 + $0x20] sm:$0xf]
      %vm206 = vcmask 293888
      %v208 = vsel %vm206, %v185, 0
      %v211 = vsel %vm206, %v186, 0
      %v214 = vsel %vm206, %v187, 0
      %v217 = vsel %vm206, %v188, 0
      %v220 = vsel %vm206, %v189, 0
      %v223 = vsel %vm206, %v190, 0
      %v226 = vsel %vm206, %v191, 0
      %v229 = vsel %vm206, %v192, 0
      %v232 = vsel %vm206, %v193, 0
      %v235 = vsel %vm206, %v194, 0
      %v238 = vsel %vm206, %v195, 0
      %v241 = vsel %vm206, %v196, 0
      %v244 = vsel %vm206, %v197, 0
      %v247 = vsel %vm206, %v198, 0
      %v250 = vsel %vm206, %v199, 0
      %v253 = vsel %vm206, %v200, 0
      %vm255 = vcmask 1043456
      %v257 = vsel %vm255, %v205, 0
      %259 = vmatprep.subr.mxu0 0.0
      %260 = vmatpush1.msra.mxu0 0.0
      %261 = vmatprep.subr.mxu0 0.0
      %262 = vmatpush1.msra.mxu0 0.0
      %263 = vmatprep.subr.mxu0 0.0
      %264 = vmatpush1.msra.mxu0 0.0
      %265 = vmatprep.subr.mxu0 0.0
      %266 = vmatpush1.msra.mxu0 0.0
      %267 = vmatprep.subr.mxu0 0.0
      %268 = vmatpush1.msra.mxu0 0.0
      %269 = vmatprep.subr.mxu0 0.0
      %270 = vmatpush1.msra.mxu0 0.0
      %271 = vmatprep.subr.mxu0 0.0
      %272 = vmatpush1.msra.mxu0 0.0
      %273 = vmatprep.subr.mxu0 0.0
      %274 = vmatpush1.msra.mxu0 0.0
      %275 = vmatprep.subr.mxu0 0.0
      %276 = vmatpush1.msra.mxu0 0.0
      %277 = vmatprep.subr.mxu0 0.0
      %278 = vmatpush1.msra.mxu0 0.0
      %279 = vmatprep.subr.mxu0 0.0
      %280 = vmatpush1.msra.mxu0 0.0
      %281 = vmatprep.subr.mxu0 0.0
      %282 = vmatpush1.msra.mxu0 %v257
      %283 = vmatprep.subr.mxu0 0.0
      %284 = vmatpush1.msra.mxu0 %v204
      %285 = vmatprep.subr.mxu0 0.0
      %286 = vmatpush1.msra.mxu0 %v203
      %287 = vmatprep.subr.mxu0 0.0
      %288 = vmatpush1.msra.mxu0 %v202
      %289 = vmatprep.subr.mxu0 0.0
      %290 = vmatpush1.msra.mxu0 %v201
      %291 = vmatprep.subr.mxu0 0.0
      %292 = vmatpush2.msra.mxu0 0.0
      %293 = vmatprep.subr.mxu0 0.0
      %294 = vmatpush2.msra.mxu0 0.0
      %295 = vmatprep.subr.mxu0 0.0
      %296 = vmatpush2.msra.mxu0 0.0
      %297 = vmatprep.subr.mxu0 0.0
      %298 = vmatpush2.msra.mxu0 0.0
      %299 = vmatprep.subr.mxu0 0.0
      %300 = vmatpush2.msra.mxu0 0.0
      %301 = vmatprep.subr.mxu0 0.0
      %302 = vmatpush2.msra.mxu0 0.0
      %303 = vmatprep.subr.mxu0 0.0
      %304 = vmatpush2.msra.mxu0 0.0
      %305 = vmatprep.subr.mxu0 0.0
      %306 = vmatpush2.msra.mxu0 0.0
      %307 = vmatprep.subr.mxu0 0.0
      %308 = vmatpush2.msra.mxu0 0.0
      %309 = vmatprep.subr.mxu0 0.0
      %310 = vmatpush2.msra.mxu0 0.0
      %311 = vmatprep.subr.mxu0 0.0
      %312 = vmatpush2.msra.mxu0 0.0
      %313 = vmatprep.subr.mxu0 0.0
      %314 = vmatpush2.msra.mxu0 0.0
      %315 = vmatprep.subr.mxu0 0.0
      %316 = vmatpush2.msra.mxu0 0.0
      %317 = vmatprep.subr.mxu0 0.0
      %318 = vmatpush2.msra.mxu0 0.0
      %319 = vmatprep.subr.mxu0 0.0
      %320 = vmatpush2.msra.mxu0 0.0
      %321 = vmatprep.subr.mxu0 0.0
      %322 = vmatpush2.msra.mxu0 0.0
      %323 = vmatprep.mubr.f32.mxu0 0.0
      %324 = vmatmul.mubr.f32.gmra.mxu0 %v208
      %v325 = vpop.f32.mrf.mxu0
      %v326 = vadd.f32 0.0, %v325
      %v327 = vpop.f32.mrf.mxu0
      %328 = vmatprep.mubr.f32.mxu0 0.0
      %329 = vmatmul.mubr.f32.gmra.mxu0 %v211
      %v330 = vpop.f32.mrf.mxu0
      %v331 = vadd.f32 0.0, %v330
      %v332 = vpop.f32.mrf.mxu0
      %333 = vmatprep.mubr.f32.mxu0 0.0
      %334 = vmatmul.mubr.f32.gmra.mxu0 %v214
      %v335 = vpop.f32.mrf.mxu0
      %v336 = vadd.f32 0.0, %v335
      %v337 = vpop.f32.mrf.mxu0
      %338 = vmatprep.mubr.f32.mxu0 0.0
      %339 = vmatmul.mubr.f32.gmra.mxu0 %v217
      %v340 = vpop.f32.mrf.mxu0
      %v341 = vadd.f32 0.0, %v340
      %v342 = vpop.f32.mrf.mxu0
      %343 = vmatprep.mubr.f32.mxu0 0.0
      %344 = vmatmul.mubr.f32.gmra.mxu0 %v220
      %v345 = vpop.f32.mrf.mxu0
      %v346 = vadd.f32 0.0, %v345
      %v347 = vpop.f32.mrf.mxu0
      %348 = vmatprep.mubr.f32.mxu0 0.0
      %349 = vmatmul.mubr.f32.gmra.mxu0 %v223
      %v350 = vpop.f32.mrf.mxu0
      %v351 = vadd.f32 0.0, %v350
      %v352 = vpop.f32.mrf.mxu0
      %353 = vmatprep.mubr.f32.mxu0 0.0
      %354 = vmatmul.mubr.f32.gmra.mxu0 %v226
      %v355 = vpop.f32.mrf.mxu0
      %v356 = vadd.f32 0.0, %v355
      %v357 = vpop.f32.mrf.mxu0
      %358 = vmatprep.mubr.f32.mxu0 0.0
      %359 = vmatmul.mubr.f32.gmra.mxu0 %v229
      %v360 = vpop.f32.mrf.mxu0
      %v361 = vadd.f32 0.0, %v360
      %v362 = vpop.f32.mrf.mxu0
      %363 = vmatprep.mubr.f32.mxu0 0.0
      %364 = vmatmul.mubr.f32.gmra.mxu0 %v232
      %v365 = vpop.f32.mrf.mxu0
      %v366 = vadd.f32 0.0, %v365
      %v367 = vpop.f32.mrf.mxu0
      %368 = vmatprep.mubr.f32.mxu0 0.0
      %369 = vmatmul.mubr.f32.gmra.mxu0 %v235
      %v370 = vpop.f32.mrf.mxu0
      %v371 = vadd.f32 0.0, %v370
      %v372 = vpop.f32.mrf.mxu0
      %373 = vmatprep.mubr.f32.mxu0 0.0
      %374 = vmatmul.mubr.f32.gmra.mxu0 %v238
      %v375 = vpop.f32.mrf.mxu0
      %v376 = vadd.f32 0.0, %v375
      %v377 = vpop.f32.mrf.mxu0
      %378 = vmatprep.mubr.f32.mxu0 0.0
      %379 = vmatmul.mubr.f32.gmra.mxu0 %v241
      %v380 = vpop.f32.mrf.mxu0
      %v381 = vadd.f32 0.0, %v380
      %v382 = vpop.f32.mrf.mxu0
      %383 = vmatprep.mubr.f32.mxu0 0.0
      %384 = vmatmul.mubr.f32.gmra.mxu0 %v244
      %v385 = vpop.f32.mrf.mxu0
      %v386 = vadd.f32 0.0, %v385
      %v387 = vpop.f32.mrf.mxu0
      %388 = vmatprep.mubr.f32.mxu0 0.0
      %389 = vmatmul.mubr.f32.gmra.mxu0 %v247
      %v390 = vpop.f32.mrf.mxu0
      %v391 = vadd.f32 0.0, %v390
      %v392 = vpop.f32.mrf.mxu0
      %393 = vmatprep.mubr.f32.mxu0 0.0
      %394 = vmatmul.mubr.f32.gmra.mxu0 %v250
      %v395 = vpop.f32.mrf.mxu0
      %v396 = vadd.f32 0.0, %v395
      %v397 = vpop.f32.mrf.mxu0
      %398 = vmatprep.mubr.f32.mxu0 0.0
      %399 = vmatmul.mubr.f32.gmra.mxu0 %v253
      %v400 = vpop.f32.mrf.mxu0
      %v401 = vadd.f32 0.0, %v400
      %v402 = vpop.f32.mrf.mxu0
      %403 = vdwg.mxu0
      %404 = vst [vmem:[%s179] sm:$0xff] %v326
      %405 = vst [vmem:[%s179 + $0x8] sm:$0xff] %v331
      %406 = vst [vmem:[%s179 + $0x10] sm:$0xff] %v336
      %407 = vst [vmem:[%s179 + $0x18] sm:$0xff] %v341
      %408 = vst [vmem:[%s179 + $0x20] sm:$0xff] %v346
      %409 = vst [vmem:[%s179 + $0x28] sm:$0xff] %v351
      %410 = vst [vmem:[%s179 + $0x30] sm:$0xff] %v356
      %411 = vst [vmem:[%s179 + $0x38] sm:$0xff] %v361
      %412 = vst [vmem:[%s179 + $0x40] sm:$0xff] %v366
      %413 = vst [vmem:[%s179 + $0x48] sm:$0xff] %v371
      %414 = vst [vmem:[%s179 + $0x50] sm:$0xff] %v376
      %415 = vst [vmem:[%s179 + $0x58] sm:$0xff] %v381
      %416 = vst [vmem:[%s179 + $0x60] sm:$0xff] %v386
      %417 = vst [vmem:[%s179 + $0x68] sm:$0xff] %v391
      %418 = vst [vmem:[%s179 + $0x70] sm:$0xff] %v396
      %419 = vst [vmem:[%s179 + $0x78] sm:$0xff] %v401
      %v420 = vadd.f32 %v326, %v331
      %v421 = vadd.f32 %v420, %v336
      %v422 = vadd.f32 %v421, %v341
      %v423 = vadd.f32 %v422, %v346
      %v424 = vadd.f32 %v423, %v351
      %v425 = vadd.f32 %v424, %v356
      %v426 = vadd.f32 %v425, %v361
      %v427 = vadd.f32 %v426, %v366
      %v428 = vadd.f32 %v427, %v371
      %v429 = vadd.f32 %v428, %v376
      %v430 = vadd.f32 %v429, %v381
      %v431 = vadd.f32 %v430, %v386
      %v432 = vadd.f32 %v431, %v391
      %v433 = vadd.f32 %v432, %v396
      %v434 = vadd.f32 %v433, %v401
      %v435 = vrot.slane %v434, 4
      %v436 = vadd.f32 %v434, %v435
      %v437 = vrot.slane %v436, 2
      %v438 = vadd.f32 %v436, %v437
      %v439 = vrot.slane %v438, 1
      %v440 = vadd.f32 %v438, %v439
      %v441 = vmul.f32 %v326, %v326
      %v442 = vmul.f32 %v331, %v331
      %v443 = vmul.f32 %v336, %v336
      %v444 = vmul.f32 %v341, %v341
      %v445 = vmul.f32 %v346, %v346
      %v446 = vmul.f32 %v351, %v351
      %v447 = vmul.f32 %v356, %v356
      %v448 = vmul.f32 %v361, %v361
      %v449 = vmul.f32 %v366, %v366
      %v450 = vmul.f32 %v371, %v371
      %v451 = vmul.f32 %v376, %v376
      %v452 = vmul.f32 %v381, %v381
      %v453 = vmul.f32 %v386, %v386
      %v454 = vmul.f32 %v391, %v391
      %v455 = vmul.f32 %v396, %v396
      %v456 = vmul.f32 %v401, %v401
      %v457 = vadd.f32 %v441, %v442
      %v458 = vadd.f32 %v457, %v443
      %v459 = vadd.f32 %v458, %v444
      %v460 = vadd.f32 %v459, %v445
      %v461 = vadd.f32 %v460, %v446
      %v462 = vadd.f32 %v461, %v447
      %v463 = vadd.f32 %v462, %v448
      %v464 = vadd.f32 %v463, %v449
      %v465 = vadd.f32 %v464, %v450
      %v466 = vadd.f32 %v465, %v451
      %v467 = vadd.f32 %v466, %v452
      %v468 = vadd.f32 %v467, %v453
      %v469 = vadd.f32 %v468, %v454
      %v470 = vadd.f32 %v469, %v455
      %v471 = vadd.f32 %v470, %v456
      %v472 = vrot.slane %v471, 4
      %v473 = vadd.f32 %v471, %v472
      %v474 = vrot.slane %v473, 2
      %v475 = vadd.f32 %v473, %v474
      %v476 = vrot.slane %v475, 1
      %v477 = vadd.f32 %v475, %v476
      %vm478 = vcmask 1040384
      %v479 = vsel %vm478, %v440, %v477
      %480 = vst [vmem:[%s184] sm:$0x3] %v479
      %s481 = smul.u32 16, %s15
      %p482 = scmp.lt.s32.totalorder %s481, 63
      %s483 = scalar_select %p482, %s481, 63
      %s484 = smul.addr %s483, 8
      %s485 = scalar_lea.vmem %s2, %s484
      %p486 = scmp.lt.s32.totalorder %s15, 3
      %s487 = scalar_select %p486, %s15, 3
      %s488 = smul.addr %s487, 2
      %s489 = scalar_lea.vmem %s3, %s488
      // Predicated region
      $region29: #{conv2d_bn_relu.2} parent=27 // pred_check
        %p490 = pneg %p80
      $region30: #{conv2d_bn_relu.2} parent=27 // pred_check_branch
        %492 = sbr.rel (%p490) target = $region32
      $region31: #{conv2d_bn_relu.2} parent=27 // pred_region
        %s493 = smul.u32 16, %s15
      $region32: #{conv2d_bn_relu.2} parent=27 // pred_fallthru
        _
      // Predicated region
      $region33: #{conv2d_bn_relu.2} parent=27 // pred_check
        %p494 = pneg %p106
      $region34: #{conv2d_bn_relu.2} parent=27 // pred_check_branch
        %496 = sbr.rel (%p494) target = $region36
      $region35: #{conv2d_bn_relu.2} parent=27 // pred_region
        _
      $region36: #{conv2d_bn_relu.2} parent=27 // pred_fallthru
        _
    $region28: #{conv2d_bn_relu.2} parent=5 // pred_fallthru
      _
    %p497 = scmp.le.s32.totalorder 2, %s10
    // Predicated region
    $region37: #{conv2d_bn_relu.2} parent=5 // pred_check
      %p498 = pneg %p497
    $region38: #{conv2d_bn_relu.2} parent=5 // pred_check_branch
      %500 = sbr.rel (%p498) target = $region40
    $region39: #{conv2d_bn_relu.2} parent=5 // pred_region
      %s501 = ssub.s32 %s10, 2
      // Predicated region
      $region41: #{conv2d_bn_relu.2} parent=39 // pred_check
        %p502 = pneg %p86
      $region42: #{conv2d_bn_relu.2} parent=39 // pred_check_branch
        %504 = sbr.rel (%p502) target = $region44
      $region43: #{conv2d_bn_relu.2} parent=39 // pred_region
        %s505 = smul.u32 16, %s16
        %p506 = scmp.lt.s32.totalorder %s505, 63
        %s507 = scalar_select %p506, %s505, 63
        %s508 = smul.addr %s507, 8
        %s509 = scalar_lea.vmem %s2, %s508
      $region44: #{conv2d_bn_relu.2} parent=39 // pred_fallthru
        _
      // Predicated region
      $region45: #{conv2d_bn_relu.2} parent=39 // pred_check
        %p510 = pneg %p112
      $region46: #{conv2d_bn_relu.2} parent=39 // pred_check_branch
        %512 = sbr.rel (%p510) target = $region48
      $region47: #{conv2d_bn_relu.2} parent=39 // pred_region
        %p513 = scmp.lt.s32.totalorder %s16, 3
        %s514 = scalar_select %p513, %s16, 3
        %s515 = smul.addr %s514, 2
        %s516 = scalar_lea.vmem %s3, %s515
      $region48: #{conv2d_bn_relu.2} parent=39 // pred_fallthru
        _
    $region40: #{conv2d_bn_relu.2} parent=5 // pred_fallthru
      _
  $region6: #{conv2d_bn_relu.2} parent=0 // loop_footer
    %s14 = sadd.s32 1, %s10
  $region7: #{conv2d_bn_relu.2} parent=0 // loop_footer_branch
    %9 = sbr.rel target = $region3
  $region8: #{conv2d_bn_relu.2} parent=0 // loop_exit
    _

</llo_original>
